<compile_context>
chip_gen: v6e
topology: v6e:2x2x1
jax: 0.10.0
libtpu: 0.0.40
codegen_flags: <defaults>
</compile_context>

<pallas_src>
import functools

import jax
import jax.numpy as jnp
from jax.experimental import pallas as pl
from jax.experimental.pallas import tpu as pltpu

_LANE = 128
_SUBLANE = 8


def _round_up(n, m):
    return ((n + m - 1) // m) * m


def _nbytes(a):
    return a.size * a.dtype.itemsize


def _orthogonal(key, shape, gain=1.0, dtype=jnp.float32):
    """Deterministic orthogonal init matching torch.nn.init.orthogonal_ semantics.

    `shape` is (out_features, in_features) like a PyTorch Linear weight.
    The spec module uses the default gain=1.0 for all three layers.
    """
    rows, cols = shape
    flat = jax.random.normal(key, (max(rows, cols), min(rows, cols)), dtype=dtype)
    q, r = jnp.linalg.qr(flat)
    d = jnp.sign(jnp.diag(r))          # sign fix -> unique decomposition
    q = q * d[None, :]
    if rows < cols:
        q = q.T
    return gain * q[:rows, :cols]


def _pad_to(x, shape):
    pads = [(0, t - s) for s, t in zip(x.shape, shape)]
    return jnp.pad(x, pads)


def _critic_kernel(s_ref, w1_ref, b1_ref, w2_ref, b2_ref, w3_ref, b3_ref, out_ref,
                   *, matmul_dtype):
    # s_ref:  [TB, S]   (batch tile on sublanes, features on lanes; streamed)
    # w1_ref: [S,  Hp]  w2_ref: [Hp, Hp]   (whole arrays, single VMEM-resident copy)
    # b1/b2:  [1,  Hp]  w3_ref: [1, Hp]    b3_ref: [1] scalar in SMEM
    # out:    [TB, 1]
    h1 = jnp.tanh(
        jnp.dot(s_ref[...].astype(matmul_dtype), w1_ref[...],
                preferred_element_type=jnp.float32)
        + b1_ref[...]
    )
    h2 = jnp.tanh(
        jnp.dot(h1.astype(matmul_dtype), w2_ref[...],
                preferred_element_type=jnp.float32)
        + b2_ref[...]
    )
    # fc3 (N=1 matmul) as VPU multiply + lane (XLU) reduction; the MXU stays free.
    v = jnp.sum(h2 * w3_ref[...], axis=-1, keepdims=True) + b3_ref[0]
    out_ref[...] = v.astype(out_ref.dtype)


def critic_forward(s, params, *, block_b=2048, use_bf16_matmul=True,
                   use_core_parallel=False):
    """Critic forward pass as a single batch-tiled Pallas kernel.

    s: [B, state_dim] float32
    params: dict from `init_critic_params` (weights stored [in, out], hidden
            width zero-padded to a multiple of 128, cached bf16 weight copies).
    use_bf16_matmul: bf16 MXU operands with f32 accumulate/bias/tanh (default);
            set False for exact f32 parity with the PyTorch module.
    use_core_parallel: opt-in explicit 2-TensorCore batch sharding (v7x/megacore).
    returns: [B, 1] float32
    """
    B, S = s.shape
    Hp = params["w1"].shape[1]

    if use_bf16_matmul:
        mm_dtype = jnp.bfloat16
        w1 = params.get("w1_bf16", params["w1"].astype(jnp.bfloat16))
        w2 = params.get("w2_bf16", params["w2"].astype(jnp.bfloat16))
    else:
        mm_dtype = jnp.float32
        w1 = params["w1"]
        w2 = params["w2"]
    b1, b2, w3, b3 = params["b1"], params["b2"], params["w3"], params["b3"]

    # Batch tiling: sublane-aligned, capped at block_b. No host-side padding:
    # pl.cdiv + Pallas edge masking handle a ragged final block.
    tile_b = min(block_b, _round_up(B, _SUBLANE))
    grid = (pl.cdiv(B, tile_b),)

    cost = pl.CostEstimate(
        flops=int(2 * B * (S * Hp + Hp * Hp + Hp)),
        transcendentals=int(2 * B * Hp),
        bytes_accessed=int(_nbytes(s) + _nbytes(w1) + _nbytes(w2) + _nbytes(b1)
                           + _nbytes(b2) + _nbytes(w3) + _nbytes(b3) + B * 4),
    )

    # Explicit VMEM budget sized to actual usage, clamped to v7x's 64 MiB/TC.
    weight_bytes = _nbytes(w1) + _nbytes(w2) + _nbytes(b1) + _nbytes(b2) + _nbytes(w3)
    stream_bytes = 2 * tile_b * S * s.dtype.itemsize   # double-buffered activation tile
    out_bytes = 2 * tile_b * _LANE * 4                 # output tile (lane-padded), 2 bufs
    interm_bytes = 4 * tile_b * Hp * 4                 # h1/h2/casts/temps (f32)
    vmem_limit = weight_bytes + stream_bytes + out_bytes + interm_bytes + (4 << 20)
    vmem_limit = int(min(max(vmem_limit, 8 << 20), 64 << 20))
    # TODO(synk): for very large hidden widths (w2 approaching VMEM capacity),
    # switch fc2 to a K-tiled grid axis with a VMEM accumulator instead of a
    # fully-resident w2.

    dim_sem = (pltpu.CORE_PARALLEL,) if use_core_parallel else ("parallel",)

    out = pl.pallas_call(
        functools.partial(_critic_kernel, matmul_dtype=mm_dtype),
        out_shape=jax.ShapeDtypeStruct((B, 1), jnp.float32),
        grid=grid,
        in_specs=[
            pl.BlockSpec((tile_b, S), lambda i: (i, 0)),         # streamed activations
            pl.BlockSpec(memory_space=pltpu.MemorySpace.VMEM),   # w1 (resident, 1 copy)
            pl.BlockSpec(memory_space=pltpu.MemorySpace.VMEM),   # b1
            pl.BlockSpec(memory_space=pltpu.MemorySpace.VMEM),   # w2
            pl.BlockSpec(memory_space=pltpu.MemorySpace.VMEM),   # b2
            pl.BlockSpec(memory_space=pltpu.MemorySpace.VMEM),   # w3
            pl.BlockSpec(memory_space=pltpu.MemorySpace.SMEM),   # b3 scalar
        ],
        out_specs=pl.BlockSpec((tile_b, 1), lambda i: (i, 0)),
        compiler_params=pltpu.CompilerParams(
            dimension_semantics=dim_sem,
            vmem_limit_bytes=vmem_limit,
        ),
        cost_estimate=cost,
    )(s, w1, b1, w2, b2, w3, b3)

    return out


def init_critic_params(key, state_dim, hidden_width, *, store_bf16=True):
    """Mirror Critic.__init__: orthogonal weights (gain=1.0), zero biases.

    Weights are stored [in, out] (kernel computes x @ W + b, equivalent to the
    PyTorch x @ weight.T + bias), hidden width zero-padded to a multiple of 128
    for lane/MXU alignment (zero padding leaves the math exact).  bf16 copies
    of the matmul weights are cached so the fast path never re-casts per call.
    """
    hp = _round_up(hidden_width, _LANE)
    k1, k2, k3 = jax.random.split(key, 3)
    w1 = _pad_to(_orthogonal(k1, (hidden_width, state_dim)).T, (state_dim, hp))  # [S, Hp]
    w2 = _pad_to(_orthogonal(k2, (hidden_width, hidden_width)).T, (hp, hp))      # [Hp, Hp]
    w3 = _pad_to(_orthogonal(k3, (1, hidden_width)), (1, hp))                    # [1, Hp]
    params = {
        "w1": w1,
        "b1": jnp.zeros((1, hp), jnp.float32),
        "w2": w2,
        "b2": jnp.zeros((1, hp), jnp.float32),
        "w3": w3,
        "b3": jnp.zeros((1,), jnp.float32),
    }
    if store_bf16:
        params["w1_bf16"] = w1.astype(jnp.bfloat16)
        params["w2_bf16"] = w2.astype(jnp.bfloat16)
    return params


def critic_reference(s, params):
    """Pure-JAX reference (padding columns are zero, so this equals the unpadded MLP)."""
    h1 = jnp.tanh(s @ params["w1"] + params["b1"])
    h2 = jnp.tanh(h1 @ params["w2"] + params["b2"])
    return h2 @ params["w3"].T + params["b3"]


if __name__ == "__main__":
    key = jax.random.PRNGKey(0)
    k_param, k_input = jax.random.split(key)

    batch = 8
    state_dim = 16
    hidden_width = 32

    params = init_critic_params(k_param, state_dim, hidden_width)
    s = jax.random.normal(k_input, (batch, state_dim), dtype=jnp.float32)
    v_ref = critic_reference(s, params)

    # Exact-parity f32 matmul path.
    v_f32 = critic_forward(s, params, use_bf16_matmul=False)
    jax.block_until_ready(v_f32)
    assert v_f32.shape == (batch, 1)
    assert jnp.allclose(v_f32, v_ref, atol=1e-5, rtol=1e-5)

    # Default bf16-operand fast path (f32 accumulate / bias / tanh).
    v_bf16 = critic_forward(s, params)
    jax.block_until_ready(v_bf16)
    assert v_bf16.shape == (batch, 1)
    assert jnp.allclose(v_bf16, v_ref, atol=5e-2, rtol=5e-2)

    # Ragged batch: B not a multiple of the tile -> Pallas masks the edge block,
    # no host-side pad / slice copies are made.
    batch2 = 20
    s2 = jax.random.normal(jax.random.PRNGKey(1), (batch2, state_dim), dtype=jnp.float32)
    v2 = critic_forward(s2, params, block_b=16, use_bf16_matmul=False)
    jax.block_until_ready(v2)
    assert v2.shape == (batch2, 1)
    assert jnp.allclose(v2, critic_reference(s2, params), atol=1e-5, rtol=1e-5)

    print("KERNEL_OK")
</pallas_src>

<mosaic_0001>
module attributes {stable_mosaic.version = 11 : i64} {
  func.func @_critic_kernel(%arg0: i32, %arg1: memref<8x16xf32, #tpu.memory_space<vmem>>, %arg2: memref<16x128xf32, #tpu.memory_space<vmem>>, %arg3: memref<1x128xf32, #tpu.memory_space<vmem>>, %arg4: memref<128x128xf32, #tpu.memory_space<vmem>>, %arg5: memref<1x128xf32, #tpu.memory_space<vmem>>, %arg6: memref<1x128xf32, #tpu.memory_space<vmem>>, %arg7: memref<1xf32, #tpu.memory_space<smem>>, %arg8: memref<8x1xf32, #tpu.memory_space<vmem>>) attributes {dimension_semantics = [#tpu.dimension_semantics<parallel>], iteration_bounds = array<i64: 1>, scalar_prefetch = 0 : i64, scratch_operands = 0 : i64, tpu.core_type = #tpu.core_type<tc>, window_params = [{transform_indices = @transform_0, window_bounds = array<i64: 8, 16>}, {pipeline_mode = #tpu.pipeline_mode<synchronous>, transform_indices = @transform_1, window_bounds = array<i64: 16, 128>}, {pipeline_mode = #tpu.pipeline_mode<synchronous>, transform_indices = @transform_2, window_bounds = array<i64: 1, 128>}, {pipeline_mode = #tpu.pipeline_mode<synchronous>, transform_indices = @transform_3, window_bounds = array<i64: 128, 128>}, {pipeline_mode = #tpu.pipeline_mode<synchronous>, transform_indices = @transform_4, window_bounds = array<i64: 1, 128>}, {pipeline_mode = #tpu.pipeline_mode<synchronous>, transform_indices = @transform_5, window_bounds = array<i64: 1, 128>}, {transform_indices = @transform_6, window_bounds = array<i64: 1>}, {transform_indices = @transform_7, window_bounds = array<i64: 8, 1>}]} {
    %c0 = arith.constant 0 : index
    %c0_0 = arith.constant 0 : index
    %0 = vector.load %arg1[%c0, %c0_0] : memref<8x16xf32, #tpu.memory_space<vmem>>, vector<8x16xf32>
    %c0_1 = arith.constant 0 : index
    %c0_2 = arith.constant 0 : index
    %1 = vector.load %arg2[%c0_1, %c0_2] : memref<16x128xf32, #tpu.memory_space<vmem>>, vector<16x128xf32>
    %cst = arith.constant dense<0.000000e+00> : vector<8x128xf32>
    %2 = tpu.matmul %0, %1, %cst {dimension_numbers = #tpu.dot_dimension_numbers<[1], [0], [0], [1], [0, 0, 1, 1], [], []>} : vector<8x16xf32>, vector<16x128xf32>, vector<8x128xf32> -> vector<8x128xf32>
    %c0_3 = arith.constant 0 : index
    %c0_4 = arith.constant 0 : index
    %3 = vector.load %arg3[%c0_3, %c0_4] : memref<1x128xf32, #tpu.memory_space<vmem>>, vector<1x128xf32>
    %4 = vector.broadcast %3 : vector<1x128xf32> to vector<8x128xf32>
    %5 = arith.addf %2, %4 : vector<8x128xf32>
    %6 = math.tanh %5 : vector<8x128xf32>
    %c0_5 = arith.constant 0 : index
    %c0_6 = arith.constant 0 : index
    %7 = vector.load %arg4[%c0_5, %c0_6] : memref<128x128xf32, #tpu.memory_space<vmem>>, vector<128x128xf32>
    %cst_7 = arith.constant dense<0.000000e+00> : vector<8x128xf32>
    %8 = tpu.matmul %6, %7, %cst_7 {dimension_numbers = #tpu.dot_dimension_numbers<[1], [0], [0], [1], [0, 0, 1, 1], [], []>} : vector<8x128xf32>, vector<128x128xf32>, vector<8x128xf32> -> vector<8x128xf32>
    %c0_8 = arith.constant 0 : index
    %c0_9 = arith.constant 0 : index
    %9 = vector.load %arg5[%c0_8, %c0_9] : memref<1x128xf32, #tpu.memory_space<vmem>>, vector<1x128xf32>
    %10 = vector.broadcast %9 : vector<1x128xf32> to vector<8x128xf32>
    %11 = arith.addf %8, %10 : vector<8x128xf32>
    %12 = math.tanh %11 : vector<8x128xf32>
    %c0_10 = arith.constant 0 : index
    %c0_11 = arith.constant 0 : index
    %13 = vector.load %arg6[%c0_10, %c0_11] : memref<1x128xf32, #tpu.memory_space<vmem>>, vector<1x128xf32>
    %14 = vector.broadcast %13 : vector<1x128xf32> to vector<8x128xf32>
    %15 = arith.mulf %12, %14 : vector<8x128xf32>
    %cst_12 = arith.constant dense<0.000000e+00> : vector<8xf32>
    %16 = vector.multi_reduction <add>, %15, %cst_12 [1] : vector<8x128xf32> to vector<8xf32>
    %17 = vector.shape_cast %16 : vector<8xf32> to vector<8x1xf32>
    %c0_13 = arith.constant 0 : index
    %18 = memref.load %arg7[%c0_13] : memref<1xf32, #tpu.memory_space<smem>>
    %19 = vector.broadcast %18 : f32 to vector<8x1xf32>
    %20 = arith.addf %17, %19 : vector<8x1xf32>
    %c0_14 = arith.constant 0 : index
    %c0_15 = arith.constant 0 : index
    %21 = vector.load %arg8[%c0_14, %c0_15] : memref<8x1xf32, #tpu.memory_space<vmem>>, vector<8x1xf32>
    tpu.vector_store %arg8[%c0_14, %c0_15], %20 {strides = array<i32>} : memref<8x1xf32, #tpu.memory_space<vmem>>, vector<8x1xf32>,
    return
  }
  func.func @transform_0(%arg0: i32) -> (i32, i32) {
    %c0_i32 = arith.constant 0 : i32
    %c0_i32_0 = arith.constant 0 : i32
    return %arg0, %c0_i32 : i32, i32
  }
  func.func @transform_1(%arg0: i32) -> (i32, i32) {
    %c0_i32 = arith.constant 0 : i32
    %c0_i32_0 = arith.constant 0 : i32
    %c0_i32_1 = arith.constant 0 : i32
    return %c0_i32, %c0_i32_0 : i32, i32
  }
  func.func @transform_2(%arg0: i32) -> (i32, i32) {
    %c0_i32 = arith.constant 0 : i32
    %c0_i32_0 = arith.constant 0 : i32
    %c0_i32_1 = arith.constant 0 : i32
    return %c0_i32, %c0_i32_0 : i32, i32
  }
  func.func @transform_3(%arg0: i32) -> (i32, i32) {
    %c0_i32 = arith.constant 0 : i32
    %c0_i32_0 = arith.constant 0 : i32
    %c0_i32_1 = arith.constant 0 : i32
    return %c0_i32, %c0_i32_0 : i32, i32
  }
  func.func @transform_4(%arg0: i32) -> (i32, i32) {
    %c0_i32 = arith.constant 0 : i32
    %c0_i32_0 = arith.constant 0 : i32
    %c0_i32_1 = arith.constant 0 : i32
    return %c0_i32, %c0_i32_0 : i32, i32
  }
  func.func @transform_5(%arg0: i32) -> (i32, i32) {
    %c0_i32 = arith.constant 0 : i32
    %c0_i32_0 = arith.constant 0 : i32
    %c0_i32_1 = arith.constant 0 : i32
    return %c0_i32, %c0_i32_0 : i32, i32
  }
  func.func @transform_6(%arg0: i32) -> i32 {
    %c0_i32 = arith.constant 0 : i32
    %c0_i32_0 = arith.constant 0 : i32
    return %c0_i32 : i32
  }
  func.func @transform_7(%arg0: i32) -> (i32, i32) {
    %c0_i32 = arith.constant 0 : i32
    %c0_i32_0 = arith.constant 0 : i32
    return %arg0, %c0_i32 : i32, i32
  }
}

</mosaic_0001>

<llo_original>
// kernel: tpu_custom_call.1
$region0: #{tpu_custom_call.1}
  #allocation0 [shape = 'u32[]', space=smem, size = 0x4, offset = 0x4, fixed_abs, tag = 'smem constant byte address 0x4 - core index']
  #allocation1 [shape = 'u32[144,128]{1,0:T(1,128)}', space=vmem, size = 0x12000, scoped, tag = 'internal scratch']
  #allocation2 [shape = 'f32[1]{0:T(128)S(6)}', space=smem, size = 0x200, scoped, tag = 'scoped memory for tpu_custom_call.1']
  %s0 = inlined_call_operand.hbm [shape: f32[8,16], index: 0, kind: input, shape index: {}]
  %s1 = inlined_call_operand.hbm [shape: f32[16,128], index: 1, kind: input, shape index: {}]
  %s2 = inlined_call_operand.vmem [shape: f32[1,128], index: 2, kind: input, shape index: {}]
  %s3 = inlined_call_operand.hbm [shape: f32[128,128], index: 3, kind: input, shape index: {}]
  %s4 = inlined_call_operand.vmem [shape: f32[1,128], index: 4, kind: input, shape index: {}]
  %s5 = inlined_call_operand.vmem [shape: f32[1,128], index: 5, kind: input, shape index: {}]
  %s6 = inlined_call_operand.<no memory space> [shape: f32[1], index: 6, kind: input, shape index: {}]
  %s7 = inlined_call_operand.vmem [shape: f32[8,1], index: 7, kind: output, shape index: {}]
  %s8 = sld [smem:[#allocation0]]
  $region50: #{tpu_custom_call.1} parent=0
    _
  %s10 = ssub.s32 1, %s8
  %s11 = scalar_select 0, %s10, %s8
  %12 = sst [smem:[#allocation2]] %s6
  $region1: #{tpu_custom_call.1} parent=0
    #allocation3 [shape = 'u8[4096]{0}', space=vmem, size = 0x1000, scoped, tag = 'input window, operand 0, single buffered']
    #allocation4 [shape = 's32[1]{0}', space=sflag, size = 0x4, scoped, tag = 'scoped memory for tpu_custom_call.1']
    #allocation5 [shape = 'u8[8192]{0}', space=vmem, size = 0x2000, scoped, tag = 'input window, operand 1, single buffered']
    #allocation6 [shape = 's32[1]{0}', space=sflag, size = 0x4, scoped, tag = 'scoped memory for tpu_custom_call.1']
    #allocation7 [shape = 'u8[65536]{0}', space=vmem, size = 0x10000, scoped, tag = 'input window, operand 3, single buffered']
    %13 = vsyncpa [#allocation4], 0
    %14 = vsyncpa [#allocation6], 0
    // Predicated region
    $region2: #{tpu_custom_call.1} parent=1 // pred_check
      _
    $region3: #{tpu_custom_call.1} parent=1 // pred_check_branch
      %16 = sbr.rel (0) target = $region5
    $region4: #{tpu_custom_call.1} parent=1 // pred_region
      %s18 = ssub.s32 128, 128
      %19 = vsyncadd [#allocation4], %s18
      %s21 = sshll.u32 [#allocation3], 4
      %s22 = int_to_ptr.vmem [resolvable:$true] %s21
      %24 = dma.hbm_to_vmem [thread:$0]  %s0, 128, %s22, [#allocation4]
    $region5: #{tpu_custom_call.1} parent=1 // pred_fallthru
      _
    // Predicated region
    $region6: #{tpu_custom_call.1} parent=1 // pred_check
      _
    $region7: #{tpu_custom_call.1} parent=1 // pred_check_branch
      %26 = sbr.rel (0) target = $region9
    $region8: #{tpu_custom_call.1} parent=1 // pred_region
      %s28 = ssub.s32 256, 256
      %29 = vsyncadd [#allocation6], %s28
      %s30 = sshll.u32 [#allocation5], 4
      %s31 = int_to_ptr.vmem [resolvable:$true] %s30
      %36 = dma.hbm_to_vmem [thread:$0]  %s1, 256, %s31, [#allocation6], 128, 128, 8
    $region9: #{tpu_custom_call.1} parent=1 // pred_fallthru
      _
    // Predicated region
    $region10: #{tpu_custom_call.1} parent=1 // pred_check
      _
    $region11: #{tpu_custom_call.1} parent=1 // pred_check_branch
      %38 = sbr.rel (0) target = $region13
    $region12: #{tpu_custom_call.1} parent=1 // pred_region
      _
    $region13: #{tpu_custom_call.1} parent=1 // pred_fallthru
      _
    // Predicated region
    $region14: #{tpu_custom_call.1} parent=1 // pred_check
      _
    $region15: #{tpu_custom_call.1} parent=1 // pred_check_branch
      %40 = sbr.rel (0) target = $region17
    $region16: #{tpu_custom_call.1} parent=1 // pred_region
      %s42 = ssub.s32 2048, 2048
      %43 = vsyncadd [#allocation6], %s42
      %s44 = sshll.u32 [#allocation7], 4
      %s45 = int_to_ptr.vmem [resolvable:$true] %s44
      %50 = dma.hbm_to_vmem [thread:$0]  %s3, 2048, %s45, [#allocation6], 128, 128, 8
    $region17: #{tpu_custom_call.1} parent=1 // pred_fallthru
      _
    // Predicated region
    $region18: #{tpu_custom_call.1} parent=1 // pred_check
      _
    $region19: #{tpu_custom_call.1} parent=1 // pred_check_branch
      %52 = sbr.rel (0) target = $region21
    $region20: #{tpu_custom_call.1} parent=1 // pred_region
      _
    $region21: #{tpu_custom_call.1} parent=1 // pred_fallthru
      _
    // Predicated region
    $region22: #{tpu_custom_call.1} parent=1 // pred_check
      _
    $region23: #{tpu_custom_call.1} parent=1 // pred_check_branch
      %54 = sbr.rel (0) target = $region25
    $region24: #{tpu_custom_call.1} parent=1 // pred_region
      _
    $region25: #{tpu_custom_call.1} parent=1 // pred_fallthru
      _
    // Predicated region
    $region26: #{tpu_custom_call.1} parent=1 // pred_check
      _
    $region27: #{tpu_custom_call.1} parent=1 // pred_check_branch
      %56 = sbr.rel (0) target = $region29
    $region28: #{tpu_custom_call.1} parent=1 // pred_region
      _
    $region29: #{tpu_custom_call.1} parent=1 // pred_fallthru
      _
    // Predicated region
    $region30: #{tpu_custom_call.1} parent=1 // pred_check
      _
    $region31: #{tpu_custom_call.1} parent=1 // pred_check_branch
      %58 = sbr.rel (0) target = $region33
    $region32: #{tpu_custom_call.1} parent=1 // pred_region
      %59 = dma.done [#allocation4], 128
    $region33: #{tpu_custom_call.1} parent=1 // pred_fallthru
      _
    // Predicated region
    $region34: #{tpu_custom_call.1} parent=1 // pred_check
      _
    $region35: #{tpu_custom_call.1} parent=1 // pred_check_branch
      %61 = sbr.rel (0) target = $region37
    $region36: #{tpu_custom_call.1} parent=1 // pred_region
      %62 = dma.done [#allocation6], 256
    $region37: #{tpu_custom_call.1} parent=1 // pred_fallthru
      _
    // Predicated region
    $region38: #{tpu_custom_call.1} parent=1 // pred_check
      _
    $region39: #{tpu_custom_call.1} parent=1 // pred_check_branch
      %64 = sbr.rel (0) target = $region41
    $region40: #{tpu_custom_call.1} parent=1 // pred_region
      %65 = dma.done [#allocation6], 2048
    $region41: #{tpu_custom_call.1} parent=1 // pred_fallthru
      _
    %v66 = vld [vmem:[#allocation3] sm:$0xff]
    %v67 = vld [vmem:[#allocation5] sm:$0xff]
    %v68 = vld [vmem:[#allocation5 + $0x8] sm:$0xff]
    %v69 = vld [vmem:[%s2] sm:$0x1]
    %v71 = vlaneseq
    %v72 = vshrl.u32 %v71, 7
    %v73 = vsub.s32 0, %v72
    %v74 = vrot.slane %v69, %v73
    %vm76 = vcmask 130048
    %v78 = vsel %vm76, %v66, 0
    %80 = vmatprep.subr.mxu0 0.0
    %81 = vmatpush1.msra.mxu0 0.0
    %82 = vmatprep.subr.mxu0 0.0
    %83 = vmatpush1.msra.mxu0 0.0
    %84 = vmatprep.subr.mxu0 0.0
    %85 = vmatpush1.msra.mxu0 0.0
    %86 = vmatprep.subr.mxu0 0.0
    %87 = vmatpush1.msra.mxu0 0.0
    %88 = vmatprep.subr.mxu0 0.0
    %89 = vmatpush1.msra.mxu0 0.0
    %90 = vmatprep.subr.mxu0 0.0
    %91 = vmatpush1.msra.mxu0 0.0
    %92 = vmatprep.subr.mxu0 0.0
    %93 = vmatpush1.msra.mxu0 0.0
    %94 = vmatprep.subr.mxu0 0.0
    %95 = vmatpush1.msra.mxu0 0.0
    %96 = vmatprep.subr.mxu0 0.0
    %97 = vmatpush1.msra.mxu0 0.0
    %98 = vmatprep.subr.mxu0 0.0
    %99 = vmatpush1.msra.mxu0 0.0
    %100 = vmatprep.subr.mxu0 0.0
    %101 = vmatpush1.msra.mxu0 0.0
    %102 = vmatprep.subr.mxu0 0.0
    %103 = vmatpush1.msra.mxu0 0.0
    %104 = vmatprep.subr.mxu0 0.0
    %105 = vmatpush1.msra.mxu0 0.0
    %106 = vmatprep.subr.mxu0 0.0
    %107 = vmatpush1.msra.mxu0 0.0
    %108 = vmatprep.subr.mxu0 0.0
    %109 = vmatpush1.msra.mxu0 %v68
    %110 = vmatprep.subr.mxu0 0.0
    %111 = vmatpush1.msra.mxu0 %v67
    %112 = vmatprep.subr.mxu0 0.0
    %113 = vmatpush2.msra.mxu0 0.0
    %114 = vmatprep.subr.mxu0 0.0
    %115 = vmatpush2.msra.mxu0 0.0
    %116 = vmatprep.subr.mxu0 0.0
    %117 = vmatpush2.msra.mxu0 0.0
    %118 = vmatprep.subr.mxu0 0.0
    %119 = vmatpush2.msra.mxu0 0.0
    %120 = vmatprep.subr.mxu0 0.0
    %121 = vmatpush2.msra.mxu0 0.0
    %122 = vmatprep.subr.mxu0 0.0
    %123 = vmatpush2.msra.mxu0 0.0
    %124 = vmatprep.subr.mxu0 0.0
    %125 = vmatpush2.msra.mxu0 0.0
    %126 = vmatprep.subr.mxu0 0.0
    %127 = vmatpush2.msra.mxu0 0.0
    %128 = vmatprep.subr.mxu0 0.0
    %129 = vmatpush2.msra.mxu0 0.0
    %130 = vmatprep.subr.mxu0 0.0
    %131 = vmatpush2.msra.mxu0 0.0
    %132 = vmatprep.subr.mxu0 0.0
    %133 = vmatpush2.msra.mxu0 0.0
    %134 = vmatprep.subr.mxu0 0.0
    %135 = vmatpush2.msra.mxu0 0.0
    %136 = vmatprep.subr.mxu0 0.0
    %137 = vmatpush2.msra.mxu0 0.0
    %138 = vmatprep.subr.mxu0 0.0
    %139 = vmatpush2.msra.mxu0 0.0
    %140 = vmatprep.subr.mxu0 0.0
    %141 = vmatpush2.msra.mxu0 0.0
    %142 = vmatprep.subr.mxu0 0.0
    %143 = vmatpush2.msra.mxu0 0.0
    %144 = vmatprep.mubr.f32.mxu0 0.0
    %145 = vmatmul.mubr.f32.gmra.mxu0 %v78
    %v146 = vpop.f32.mrf.mxu0
    %v147 = vadd.f32 %v74, %v146
    %v148 = vpop.f32.mrf.mxu0
    %149 = vdwg.mxu0
    %v150 = vtanh.pop %v147
    %v151 = vld [vmem:[#allocation7] sm:$0xff]
    %v152 = vld [vmem:[#allocation7 + $0x8] sm:$0xff]
    %v153 = vld [vmem:[#allocation7 + $0x10] sm:$0xff]
    %v154 = vld [vmem:[#allocation7 + $0x18] sm:$0xff]
    %v155 = vld [vmem:[#allocation7 + $0x20] sm:$0xff]
    %v156 = vld [vmem:[#allocation7 + $0x28] sm:$0xff]
    %v157 = vld [vmem:[#allocation7 + $0x30] sm:$0xff]
    %v158 = vld [vmem:[#allocation7 + $0x38] sm:$0xff]
    %v159 = vld [vmem:[#allocation7 + $0x40] sm:$0xff]
    %v160 = vld [vmem:[#allocation7 + $0x48] sm:$0xff]
    %v161 = vld [vmem:[#allocation7 + $0x50] sm:$0xff]
    %v162 = vld [vmem:[#allocation7 + $0x58] sm:$0xff]
    %v163 = vld [vmem:[#allocation7 + $0x60] sm:$0xff]
    %v164 = vld [vmem:[#allocation7 + $0x68] sm:$0xff]
    %v165 = vld [vmem:[#allocation7 + $0x70] sm:$0xff]
    %v166 = vld [vmem:[#allocation7 + $0x78] sm:$0xff]
    %v167 = vld [vmem:[%s4] sm:$0x1]
    %v169 = vlaneseq
    %v170 = vshrl.u32 %v169, 7
    %v171 = vsub.s32 0, %v170
    %v172 = vrot.slane %v167, %v171
    %174 = vmatprep.subr.mxu0 0.0
    %175 = vmatpush1.msra.mxu0 %v166
    %176 = vmatprep.subr.mxu0 0.0
    %177 = vmatpush1.msra.mxu0 %v165
    %178 = vmatprep.subr.mxu0 0.0
    %179 = vmatpush1.msra.mxu0 %v164
    %180 = vmatprep.subr.mxu0 0.0
    %181 = vmatpush1.msra.mxu0 %v163
    %182 = vmatprep.subr.mxu0 0.0
    %183 = vmatpush1.msra.mxu0 %v162
    %184 = vmatprep.subr.mxu0 0.0
    %185 = vmatpush1.msra.mxu0 %v161
    %186 = vmatprep.subr.mxu0 0.0
    %187 = vmatpush1.msra.mxu0 %v160
    %188 = vmatprep.subr.mxu0 0.0
    %189 = vmatpush1.msra.mxu0 %v159
    %190 = vmatprep.subr.mxu0 0.0
    %191 = vmatpush1.msra.mxu0 %v158
    %192 = vmatprep.subr.mxu0 0.0
    %193 = vmatpush1.msra.mxu0 %v157
    %194 = vmatprep.subr.mxu0 0.0
    %195 = vmatpush1.msra.mxu0 %v156
    %196 = vmatprep.subr.mxu0 0.0
    %197 = vmatpush1.msra.mxu0 %v155
    %198 = vmatprep.subr.mxu0 0.0
    %199 = vmatpush1.msra.mxu0 %v154
    %200 = vmatprep.subr.mxu0 0.0
    %201 = vmatpush1.msra.mxu0 %v153
    %202 = vmatprep.subr.mxu0 0.0
    %203 = vmatpush1.msra.mxu0 %v152
    %204 = vmatprep.subr.mxu0 0.0
    %205 = vmatpush1.msra.mxu0 %v151
    %206 = vmatprep.subr.mxu0 0.0
    %207 = vmatpush2.msra.mxu0 0.0
    %208 = vmatprep.subr.mxu0 0.0
    %209 = vmatpush2.msra.mxu0 0.0
    %210 = vmatprep.subr.mxu0 0.0
    %211 = vmatpush2.msra.mxu0 0.0
    %212 = vmatprep.subr.mxu0 0.0
    %213 = vmatpush2.msra.mxu0 0.0
    %214 = vmatprep.subr.mxu0 0.0
    %215 = vmatpush2.msra.mxu0 0.0
    %216 = vmatprep.subr.mxu0 0.0
    %217 = vmatpush2.msra.mxu0 0.0
    %218 = vmatprep.subr.mxu0 0.0
    %219 = vmatpush2.msra.mxu0 0.0
    %220 = vmatprep.subr.mxu0 0.0
    %221 = vmatpush2.msra.mxu0 0.0
    %222 = vmatprep.subr.mxu0 0.0
    %223 = vmatpush2.msra.mxu0 0.0
    %224 = vmatprep.subr.mxu0 0.0
    %225 = vmatpush2.msra.mxu0 0.0
    %226 = vmatprep.subr.mxu0 0.0
    %227 = vmatpush2.msra.mxu0 0.0
    %228 = vmatprep.subr.mxu0 0.0
    %229 = vmatpush2.msra.mxu0 0.0
    %230 = vmatprep.subr.mxu0 0.0
    %231 = vmatpush2.msra.mxu0 0.0
    %232 = vmatprep.subr.mxu0 0.0
    %233 = vmatpush2.msra.mxu0 0.0
    %234 = vmatprep.subr.mxu0 0.0
    %235 = vmatpush2.msra.mxu0 0.0
    %236 = vmatprep.subr.mxu0 0.0
    %237 = vmatpush2.msra.mxu0 0.0
    %238 = vmatprep.mubr.f32.mxu0 0.0
    %239 = vmatmul.mubr.f32.gmra.mxu0 %v150
    %v240 = vpop.f32.mrf.mxu0
    %v241 = vadd.f32 %v172, %v240
    %v242 = vpop.f32.mrf.mxu0
    %243 = vdwg.mxu0
    %v244 = vtanh.pop %v241
    %v245 = vld [vmem:[%s5] sm:$0x1]
    %v247 = vlaneseq
    %v248 = vshrl.u32 %v247, 7
    %v249 = vsub.s32 0, %v248
    %v250 = vrot.slane %v245, %v249
    %v252 = vmul.f32 %v244, %v250
    %253 = vadd.xlane.f32.xlu0 %v252
    %v254 = vpop.xlane.xlu0 %253
    %s255 = sld [smem:[#allocation2]]
    %v256 = vstv %s255
    %v257 = vadd.f32 %v254, %v256
    %vm258 = vcmask 7168
    %259 = vst.msk [vmem:[%s7] sm:$0xff] %vm258, %v257
    // Predicated region
    $region42: #{tpu_custom_call.1} parent=1 // pred_check
      _
    $region43: #{tpu_custom_call.1} parent=1 // pred_check_branch
      %261 = sbr.rel (0) target = $region45
    $region44: #{tpu_custom_call.1} parent=1 // pred_region
      _
    $region45: #{tpu_custom_call.1} parent=1 // pred_fallthru
      _
    // Predicated region
    $region46: #{tpu_custom_call.1} parent=1 // pred_check
      _
    $region47: #{tpu_custom_call.1} parent=1 // pred_check_branch
      %263 = sbr.rel (0) target = $region49
    $region48: #{tpu_custom_call.1} parent=1 // pred_region
      _
    $region49: #{tpu_custom_call.1} parent=1 // pred_fallthru
      _
    %264 = vsyncpa [#allocation4], 1
    %265 = vsyncpa [#allocation6], 1

</llo_original>
